<compile_context>
chip_gen: v7x
topology: tpu7x:2x2x1
jax: 0.10.0
libtpu: 0.0.40
codegen_flags: <defaults>
</compile_context>

<pallas_src>
import jax
import jax.numpy as jnp
from jax.experimental import pallas as pl
from jax.experimental.pallas import tpu as pltpu


def _swiglu_kernel(x_ref, w1_ref, b1_ref, w2_ref, b2_ref, o_ref):
    x = x_ref[...]                                                 # (tm, K) f32
    # Two MXU matmuls on the same resident x tile, f32 accumulation.
    h1 = jnp.dot(x, w1_ref[...], preferred_element_type=jnp.float32) + b1_ref[...]
    h2 = jnp.dot(x, w2_ref[...], preferred_element_type=jnp.float32) + b2_ref[...]
    # sigmoid(z) == 0.5 * (tanh(z/2) + 1): a single EUP (tanh) push per element.
    s1 = 0.5 * (jnp.tanh(0.5 * h1) + 1.0)
    s2 = 0.5 * (jnp.tanh(0.5 * h2) + 1.0)
    # SiLU(h1) * sigmoid(h2); nothing computed over columns that get discarded.
    o_ref[...] = (h1 * s1 * s2).astype(o_ref.dtype)


def _round_up(x, m):
    return ((x + m - 1) // m) * m


@jax.jit
def swiglu(x, w1, b1, w2, b2):
    M, K = x.shape
    N = w1.shape[1]

    # nn.Linear biases are 1-D; present them lane-major as (1, N) for the VPU.
    b1 = b1.reshape(1, N)
    b2 = b2.reshape(1, N)

    # M tiling: fixed 8-aligned tile, ragged tail handled by the cdiv grid
    # (Pallas masks the partial block's stores).  Keeps per-step VMEM bounded
    # on v7x's 64 MiB and preserves pipelining for large batches.
    tm = 256 if M >= 256 else _round_up(M, 8)

    # N tiling: stream weight columns.  Multiples of 128 keep output stores
    # lane-dense (important on v5e's single vst slot); 256 feeds the v6e/v7x
    # MXU width when N is large enough.
    if N % 256 == 0 and N > 256:
        tn = 256
    elif N % 128 == 0:
        tn = 128
    else:
        tn = N  # TODO(synk): pad N to a 128 multiple to avoid masked vst.msk stores.

    grid = (pl.cdiv(M, tm), pl.cdiv(N, tn))   # N innermost: weight DMA pipelines
                                              # behind MXU; x tile stays resident.

    itemsize = jnp.dtype(x.dtype).itemsize
    cost = pl.CostEstimate(
        flops=2 * M * K * (2 * N),                     # two matmuls
        transcendentals=2 * M * N,                     # two sigmoids over (M, N)
        bytes_accessed=itemsize * (M * K + 2 * K * N + 2 * N + M * N),
    )

    return pl.pallas_call(
        _swiglu_kernel,
        out_shape=jax.ShapeDtypeStruct((M, N), x.dtype),
        grid=grid,
        in_specs=[
            pl.BlockSpec((tm, K), lambda i, j: (i, 0)),    # x: constant over j
            pl.BlockSpec((K, tn), lambda i, j: (0, j)),    # W1: streamed over N
            pl.BlockSpec((1, tn), lambda i, j: (0, j)),    # b1
            pl.BlockSpec((K, tn), lambda i, j: (0, j)),    # W2: streamed over N
            pl.BlockSpec((1, tn), lambda i, j: (0, j)),    # b2
        ],
        out_specs=pl.BlockSpec((tm, tn), lambda i, j: (i, j)),
        compiler_params=pltpu.CompilerParams(
            dimension_semantics=("parallel", "parallel")),  # both axes shardable
        cost_estimate=cost,
    )(x, w1, b1, w2, b2)


def swiglu_ref(x, w1, b1, w2, b2):
    h1 = x @ w1 + b1
    h2 = x @ w2 + b2
    return jax.nn.silu(h1) * jax.nn.sigmoid(h2)


if __name__ == "__main__":
    input_dim = 128
    hidden_dim = 256
    batch = 32

    key = jax.random.PRNGKey(0)
    kx, k1w, k1b, k2w, k2b = jax.random.split(key, 5)

    x = jax.random.normal(kx, (batch, input_dim), dtype=jnp.float32)

    # Deterministic init mimicking nn.Linear: U(-1/sqrt(in), 1/sqrt(in)).
    # Weights stored transposed vs. PyTorch ([input_dim, hidden_dim]) so the
    # kernel computes x @ W directly on the MXU.
    bound = 1.0 / jnp.sqrt(jnp.float32(input_dim))
    w1 = jax.random.uniform(k1w, (input_dim, hidden_dim), jnp.float32, -bound, bound)
    b1 = jax.random.uniform(k1b, (hidden_dim,), jnp.float32, -bound, bound)
    w2 = jax.random.uniform(k2w, (input_dim, hidden_dim), jnp.float32, -bound, bound)
    b2 = jax.random.uniform(k2b, (hidden_dim,), jnp.float32, -bound, bound)

    out = swiglu(x, w1, b1, w2, b2)
    jax.block_until_ready(out)

    expected = swiglu_ref(x, w1, b1, w2, b2)
    assert out.shape == (batch, hidden_dim), out.shape
    assert jnp.allclose(out, expected, atol=1e-5, rtol=1e-5), (
        float(jnp.max(jnp.abs(out - expected))))

    print("KERNEL_OK")
</pallas_src>

<mosaic_0001>
module attributes {stable_mosaic.version = 11 : i64} {
  func.func @_swiglu_kernel(%arg0: i32, %arg1: i32, %arg2: memref<32x128xf32, #tpu.memory_space<vmem>>, %arg3: memref<128x128xf32, #tpu.memory_space<vmem>>, %arg4: memref<1x128xf32, #tpu.memory_space<vmem>>, %arg5: memref<128x128xf32, #tpu.memory_space<vmem>>, %arg6: memref<1x128xf32, #tpu.memory_space<vmem>>, %arg7: memref<32x128xf32, #tpu.memory_space<vmem>>) attributes {dimension_semantics = [#tpu.dimension_semantics<parallel>, #tpu.dimension_semantics<parallel>], iteration_bounds = array<i64: 1, 2>, scalar_prefetch = 0 : i64, scratch_operands = 0 : i64, tpu.core_type = #tpu.core_type<tc>, window_params = [{transform_indices = @transform_0, window_bounds = array<i64: 32, 128>}, {transform_indices = @transform_1, window_bounds = array<i64: 128, 128>}, {transform_indices = @transform_2, window_bounds = array<i64: 1, 128>}, {transform_indices = @transform_3, window_bounds = array<i64: 128, 128>}, {transform_indices = @transform_4, window_bounds = array<i64: 1, 128>}, {transform_indices = @transform_5, window_bounds = array<i64: 32, 128>}]} {
    %c0 = arith.constant 0 : index
    %c0_0 = arith.constant 0 : index
    %0 = vector.load %arg2[%c0, %c0_0] : memref<32x128xf32, #tpu.memory_space<vmem>>, vector<32x128xf32>
    %c0_1 = arith.constant 0 : index
    %c0_2 = arith.constant 0 : index
    %1 = vector.load %arg3[%c0_1, %c0_2] : memref<128x128xf32, #tpu.memory_space<vmem>>, vector<128x128xf32>
    %cst = arith.constant dense<0.000000e+00> : vector<32x128xf32>
    %2 = tpu.matmul %0, %1, %cst {dimension_numbers = #tpu.dot_dimension_numbers<[1], [0], [0], [1], [0, 0, 1, 1], [], []>} : vector<32x128xf32>, vector<128x128xf32>, vector<32x128xf32> -> vector<32x128xf32>
    %c0_3 = arith.constant 0 : index
    %c0_4 = arith.constant 0 : index
    %3 = vector.load %arg4[%c0_3, %c0_4] : memref<1x128xf32, #tpu.memory_space<vmem>>, vector<1x128xf32>
    %4 = vector.broadcast %3 : vector<1x128xf32> to vector<32x128xf32>
    %5 = arith.addf %2, %4 : vector<32x128xf32>
    %c0_5 = arith.constant 0 : index
    %c0_6 = arith.constant 0 : index
    %6 = vector.load %arg5[%c0_5, %c0_6] : memref<128x128xf32, #tpu.memory_space<vmem>>, vector<128x128xf32>
    %cst_7 = arith.constant dense<0.000000e+00> : vector<32x128xf32>
    %7 = tpu.matmul %0, %6, %cst_7 {dimension_numbers = #tpu.dot_dimension_numbers<[1], [0], [0], [1], [0, 0, 1, 1], [], []>} : vector<32x128xf32>, vector<128x128xf32>, vector<32x128xf32> -> vector<32x128xf32>
    %c0_8 = arith.constant 0 : index
    %c0_9 = arith.constant 0 : index
    %8 = vector.load %arg6[%c0_8, %c0_9] : memref<1x128xf32, #tpu.memory_space<vmem>>, vector<1x128xf32>
    %9 = vector.broadcast %8 : vector<1x128xf32> to vector<32x128xf32>
    %10 = arith.addf %7, %9 : vector<32x128xf32>
    %cst_10 = arith.constant 5.000000e-01 : f32
    %11 = vector.broadcast %cst_10 : f32 to vector<32x128xf32>
    %12 = arith.mulf %11, %5 : vector<32x128xf32>
    %13 = math.tanh %12 : vector<32x128xf32>
    %cst_11 = arith.constant 1.000000e+00 : f32
    %14 = vector.broadcast %cst_11 : f32 to vector<32x128xf32>
    %15 = arith.addf %13, %14 : vector<32x128xf32>
    %cst_12 = arith.constant 5.000000e-01 : f32
    %16 = vector.broadcast %cst_12 : f32 to vector<32x128xf32>
    %17 = arith.mulf %16, %15 : vector<32x128xf32>
    %cst_13 = arith.constant 5.000000e-01 : f32
    %18 = vector.broadcast %cst_13 : f32 to vector<32x128xf32>
    %19 = arith.mulf %18, %10 : vector<32x128xf32>
    %20 = math.tanh %19 : vector<32x128xf32>
    %cst_14 = arith.constant 1.000000e+00 : f32
    %21 = vector.broadcast %cst_14 : f32 to vector<32x128xf32>
    %22 = arith.addf %20, %21 : vector<32x128xf32>
    %cst_15 = arith.constant 5.000000e-01 : f32
    %23 = vector.broadcast %cst_15 : f32 to vector<32x128xf32>
    %24 = arith.mulf %23, %22 : vector<32x128xf32>
    %25 = arith.mulf %5, %17 : vector<32x128xf32>
    %26 = arith.mulf %25, %24 : vector<32x128xf32>
    %c0_16 = arith.constant 0 : index
    %c0_17 = arith.constant 0 : index
    %27 = vector.load %arg7[%c0_16, %c0_17] : memref<32x128xf32, #tpu.memory_space<vmem>>, vector<32x128xf32>
    tpu.vector_store %arg7[%c0_16, %c0_17], %26 {strides = array<i32>} : memref<32x128xf32, #tpu.memory_space<vmem>>, vector<32x128xf32>,
    return
  }
  func.func @transform_0(%arg0: i32, %arg1: i32) -> (i32, i32) {
    %c0_i32 = arith.constant 0 : i32
    %c0_i32_0 = arith.constant 0 : i32
    return %arg0, %c0_i32 : i32, i32
  }
  func.func @transform_1(%arg0: i32, %arg1: i32) -> (i32, i32) {
    %c0_i32 = arith.constant 0 : i32
    %c0_i32_0 = arith.constant 0 : i32
    return %c0_i32, %arg1 : i32, i32
  }
  func.func @transform_2(%arg0: i32, %arg1: i32) -> (i32, i32) {
    %c0_i32 = arith.constant 0 : i32
    %c0_i32_0 = arith.constant 0 : i32
    return %c0_i32, %arg1 : i32, i32
  }
  func.func @transform_3(%arg0: i32, %arg1: i32) -> (i32, i32) {
    %c0_i32 = arith.constant 0 : i32
    %c0_i32_0 = arith.constant 0 : i32
    return %c0_i32, %arg1 : i32, i32
  }
  func.func @transform_4(%arg0: i32, %arg1: i32) -> (i32, i32) {
    %c0_i32 = arith.constant 0 : i32
    %c0_i32_0 = arith.constant 0 : i32
    return %c0_i32, %arg1 : i32, i32
  }
  func.func @transform_5(%arg0: i32, %arg1: i32) -> (i32, i32) {
    %c0_i32 = arith.constant 0 : i32
    return %arg0, %arg1 : i32, i32
  }
}

</mosaic_0001>

<llo_original>
// kernel: swiglu.1
$region0: #{swiglu.1}
  #allocation0 [shape = 'u32[]', space=smem, size = 0x4, offset = 0x4, fixed_abs, tag = 'smem constant byte address 0x4 - core index']
  #allocation1 [shape = 'u32[144,128]{1,0:T(1,128)}', space=vmem, size = 0x12000, scoped, tag = 'internal scratch']
  %s0 = inlined_call_operand.hbm [shape: f32[32,128], index: 0, kind: input, shape index: {}]
  %s1 = inlined_call_operand.hbm [shape: f32[128,256], index: 1, kind: input, shape index: {}]
  %s2 = inlined_call_operand.vmem [shape: f32[1,256], index: 2, kind: input, shape index: {}]
  %s3 = inlined_call_operand.hbm [shape: f32[128,256], index: 3, kind: input, shape index: {}]
  %s4 = inlined_call_operand.vmem [shape: f32[1,256], index: 4, kind: input, shape index: {}]
  %s5 = inlined_call_operand.hbm [shape: f32[32,256], index: 5, kind: output, shape index: {}]
  %s6 = sld [smem:[#allocation0]]
  $region65: #{swiglu.1} parent=0
    _
  %s8 = ssub.s32 1, %s6
  %s9 = scalar_select 0, %s8, %s6
  $region1: #{swiglu.1} parent=0
    #allocation2 [shape = 'u8[16384]{0}', space=vmem, size = 0x4000, scoped, tag = 'input window, operand 0, single buffered']
    #allocation3 [shape = 's32[2]{0}', space=sflag, size = 0x8, scoped, tag = 'scoped memory for swiglu.1']
    #allocation4 [shape = 's32[2]{0}', space=sflag, size = 0x8, scoped, tag = 'scoped memory for swiglu.1']
    #allocation5 [shape = 'u8[131072]{0}', space=vmem, size = 0x20000, scoped, tag = 'input window, operand 1']
    #allocation6 [shape = 's32[2]{0}', space=sflag, size = 0x8, scoped, tag = 'scoped memory for swiglu.1']
    #allocation7 [shape = 'u8[131072]{0}', space=vmem, size = 0x20000, scoped, tag = 'input window, operand 3']
    #allocation8 [shape = 'u8[32768]{0}', space=vmem, size = 0x8000, scoped, tag = 'output window, operand 0']
    %10 = vsyncpa [#allocation3], 0
    %11 = vsyncpa [#allocation6], 0
    %s12 = scalar_lea.sflag [#allocation6], 1
    %13 = vsyncpa %s12, 0
    %14 = vsyncpa [#allocation4], 0
    %s15 = scalar_lea.sflag [#allocation4], 1
    %16 = vsyncpa %s15, 0
    loop: start=0, step=1, limit=4
    $region2: #{swiglu.1} parent=1 // loop_pre_header
      _
    $region3: #{swiglu.1} parent=1 // loop_header
      %s18 = sphi 0, %s22
      %p19 = scmp.ge.s32.totalorder %s18, 4
      %s25 = sphi 0, %s37
      %s26 = sphi 0, %s33
      %s27 = sphi 0, %s25
      %s28 = sphi 0, %s26
      %s29 = sphi 0, %s27
      %s30 = sphi 0, %s28
      %s40 = sphi 0, %s42
      %s43 = sphi 0, %s40
      %s44 = sphi 0, %s43
      %s60 = sphi 0, %s44
      %s66 = sphi 0, %s68
      %s69 = sphi 0, %s66
      %s70 = sphi 0, %s69
      %s86 = sphi 0, %s70
      %s92 = sphi 0, %s94
      %s95 = sphi 0, %s92
      %s96 = sphi 0, %s95
      %s112 = sphi 0, %s96
      %s118 = sphi 0, %s120
      %s121 = sphi 0, %s118
      %s122 = sphi 0, %s121
      %s138 = sphi 0, %s122
      %s144 = sphi 0, %s146
      %s147 = sphi 0, %s144
      %s148 = sphi 0, %s147
      %s164 = sphi 0, %s148
      %s172 = sphi 0, %s174
      %s175 = sphi 0, %s172
      %s176 = sphi 0, %s175
      %s192 = sphi 0, %s176
    $region4: #{swiglu.1} parent=1 // loop_header_branch
      %21 = sbr.rel (%p19) target = $region8
    $region5: #{swiglu.1} parent=1 // loop_body
      %s23 = ssub.s32 %s18, 1
      %s24 = ssub.s32 %s18, 2
      %s31 = sadd.s32 1, %s26
      %p32 = scmp.ge.s32.totalorder %s31, 2
      %s33 = scalar_select %p32, 0, %s31
      %s34 = sadd.s32 1, %s25
      %s35 = scalar_select %p32, %s34, %s25
      %p36 = scmp.ge.s32.totalorder %s35, 1
      %s37 = scalar_select %p36, 0, %s35
      %s38 = ssub.s32 %s25, %s37
      %p39 = scmp.eq.s32.totalorder %s38, 0
      %s41 = sadd.s32 %s40, 1
      %s42 = scalar_select %p39, %s40, %s41
      %p45 = pneg %p39
      %p46 = scmp.eq.s32.totalorder %s18, 1
      %p47 = por %p45, %p46
      %p48 = scmp.ne.s32.totalorder %s40, %s43
      %p49 = scmp.eq.s32.totalorder %s18, 0
      %p50 = por %p48, %p49
      %p51 = scmp.ne.s32.totalorder %s40, %s43
      %p52 = scmp.eq.s32.totalorder %s23, 1
      %p53 = por %p51, %p52
      %p54 = scmp.ne.s32.totalorder %s43, %s44
      %p55 = scmp.eq.s32.totalorder %s23, 0
      %p56 = por %p54, %p55
      %p57 = scmp.ne.s32.totalorder %s43, %s44
      %p58 = scmp.eq.s32.totalorder %s24, 1
      %p59 = por %p57, %p58
      %p61 = scmp.ne.s32.totalorder %s44, %s60
      %p62 = scmp.eq.s32.totalorder %s24, 0
      %p63 = por %p61, %p62
      %s64 = ssub.s32 %s26, %s33
      %p65 = scmp.eq.s32.totalorder %s64, 0
      %s67 = sadd.s32 %s66, 1
      %s68 = scalar_select %p65, %s66, %s67
      %p71 = pneg %p65
      %p72 = scmp.eq.s32.totalorder %s18, 1
      %p73 = por %p71, %p72
      %p74 = scmp.ne.s32.totalorder %s66, %s69
      %p75 = scmp.eq.s32.totalorder %s18, 0
      %p76 = por %p74, %p75
      %p77 = scmp.ne.s32.totalorder %s66, %s69
      %p78 = scmp.eq.s32.totalorder %s23, 1
      %p79 = por %p77, %p78
      %p80 = scmp.ne.s32.totalorder %s69, %s70
      %p81 = scmp.eq.s32.totalorder %s23, 0
      %p82 = por %p80, %p81
      %p83 = scmp.ne.s32.totalorder %s69, %s70
      %p84 = scmp.eq.s32.totalorder %s24, 1
      %p85 = por %p83, %p84
      %p87 = scmp.ne.s32.totalorder %s70, %s86
      %p88 = scmp.eq.s32.totalorder %s24, 0
      %p89 = por %p87, %p88
      %s90 = ssub.s32 %s26, %s33
      %p91 = scmp.eq.s32.totalorder %s90, 0
      %s93 = sadd.s32 %s92, 1
      %s94 = scalar_select %p91, %s92, %s93
      %p97 = pneg %p91
      %p98 = scmp.eq.s32.totalorder %s18, 1
      %p99 = por %p97, %p98
      %p100 = scmp.ne.s32.totalorder %s92, %s95
      %p101 = scmp.eq.s32.totalorder %s18, 0
      %p102 = por %p100, %p101
      %p103 = scmp.ne.s32.totalorder %s92, %s95
      %p104 = scmp.eq.s32.totalorder %s23, 1
      %p105 = por %p103, %p104
      %p106 = scmp.ne.s32.totalorder %s95, %s96
      %p107 = scmp.eq.s32.totalorder %s23, 0
      %p108 = por %p106, %p107
      %p109 = scmp.ne.s32.totalorder %s95, %s96
      %p110 = scmp.eq.s32.totalorder %s24, 1
      %p111 = por %p109, %p110
      %p113 = scmp.ne.s32.totalorder %s96, %s112
      %p114 = scmp.eq.s32.totalorder %s24, 0
      %p115 = por %p113, %p114
      %s116 = ssub.s32 %s26, %s33
      %p117 = scmp.eq.s32.totalorder %s116, 0
      %s119 = sadd.s32 %s118, 1
      %s120 = scalar_select %p117, %s118, %s119
      %p123 = pneg %p117
      %p124 = scmp.eq.s32.totalorder %s18, 1
      %p125 = por %p123, %p124
      %p126 = scmp.ne.s32.totalorder %s118, %s121
      %p127 = scmp.eq.s32.totalorder %s18, 0
      %p128 = por %p126, %p127
      %p129 = scmp.ne.s32.totalorder %s118, %s121
      %p130 = scmp.eq.s32.totalorder %s23, 1
      %p131 = por %p129, %p130
      %p132 = scmp.ne.s32.totalorder %s121, %s122
      %p133 = scmp.eq.s32.totalorder %s23, 0
      %p134 = por %p132, %p133
      %p135 = scmp.ne.s32.totalorder %s121, %s122
      %p136 = scmp.eq.s32.totalorder %s24, 1
      %p137 = por %p135, %p136
      %p139 = scmp.ne.s32.totalorder %s122, %s138
      %p140 = scmp.eq.s32.totalorder %s24, 0
      %p141 = por %p139, %p140
      %s142 = ssub.s32 %s26, %s33
      %p143 = scmp.eq.s32.totalorder %s142, 0
      %s145 = sadd.s32 %s144, 1
      %s146 = scalar_select %p143, %s144, %s145
      %p149 = pneg %p143
      %p150 = scmp.eq.s32.totalorder %s18, 1
      %p151 = por %p149, %p150
      %p152 = scmp.ne.s32.totalorder %s144, %s147
      %p153 = scmp.eq.s32.totalorder %s18, 0
      %p154 = por %p152, %p153
      %p155 = scmp.ne.s32.totalorder %s144, %s147
      %p156 = scmp.eq.s32.totalorder %s23, 1
      %p157 = por %p155, %p156
      %p158 = scmp.ne.s32.totalorder %s147, %s148
      %p159 = scmp.eq.s32.totalorder %s23, 0
      %p160 = por %p158, %p159
      %p161 = scmp.ne.s32.totalorder %s147, %s148
      %p162 = scmp.eq.s32.totalorder %s24, 1
      %p163 = por %p161, %p162
      %p165 = scmp.ne.s32.totalorder %s148, %s164
      %p166 = scmp.eq.s32.totalorder %s24, 0
      %p167 = por %p165, %p166
      %s168 = ssub.s32 %s25, %s37
      %s169 = ssub.s32 %s26, %s33
      %s170 = sor.u32 %s168, %s169
      %p171 = scmp.eq.s32.totalorder %s170, 0
      %s173 = sadd.s32 %s172, 1
      %s174 = scalar_select %p171, %s172, %s173
      %p177 = pneg %p171
      %p178 = scmp.eq.s32.totalorder %s18, 1
      %p179 = por %p177, %p178
      %p180 = scmp.ne.s32.totalorder %s172, %s175
      %p181 = scmp.eq.s32.totalorder %s18, 0
      %p182 = por %p180, %p181
      %p183 = scmp.ne.s32.totalorder %s172, %s175
      %p184 = scmp.eq.s32.totalorder %s23, 1
      %p185 = por %p183, %p184
      %p186 = scmp.ne.s32.totalorder %s175, %s176
      %p187 = scmp.eq.s32.totalorder %s23, 0
      %p188 = por %p186, %p187
      %p189 = scmp.ne.s32.totalorder %s175, %s176
      %p190 = scmp.eq.s32.totalorder %s24, 1
      %p191 = por %p189, %p190
      %p193 = scmp.ne.s32.totalorder %s176, %s192
      %p194 = scmp.eq.s32.totalorder %s24, 0
      %p195 = por %p193, %p194
      %p196 = scmp.le.s32.totalorder 1, %s18
      %p197 = scmp.lt.s32.totalorder %s18, 3
      %p198 = pnand %p196, %p197
      %p199 = pneg %p198
      // Predicated region
      $region9: #{swiglu.1} parent=5 // pred_check
        _
      $region10: #{swiglu.1} parent=5 // pred_check_branch
        %201 = sbr.rel (%p198) target = $region12
      $region11: #{swiglu.1} parent=5 // pred_region
        %s202 = ssub.s32 %s18, 1
        // Predicated region
        $region13: #{swiglu.1} parent=11 // pred_check
          %p203 = pneg %p56
        $region14: #{swiglu.1} parent=11 // pred_check_branch
          %205 = sbr.rel (%p203) target = $region16
        $region15: #{swiglu.1} parent=11 // pred_region
          %s206 = smul.u32 4, %s27
          %s208 = ssub.s32 512, 512
          %209 = vsyncadd [#allocation3], %s208
          %s210 = smul.addr %s206, 128
          %s211 = scalar_lea.hbm %s0, %s210
          %s212 = sshll.u32 [#allocation2], 4
          %s213 = int_to_ptr.vmem [resolvable:$true] %s212
          %218 = dma.hbm_to_vmem [thread:$0]  %s211, 512, %s213, [#allocation3], 128, 128, 8
        $region16: #{swiglu.1} parent=11 // pred_fallthru
          _
      $region12: #{swiglu.1} parent=5 // pred_fallthru
        _
      %p219 = scmp.lt.s32.totalorder %s18, 2
      // Predicated region
      $region17: #{swiglu.1} parent=5 // pred_check
        %p220 = pneg %p219
      $region18: #{swiglu.1} parent=5 // pred_check_branch
        %222 = sbr.rel (%p220) target = $region20
      $region19: #{swiglu.1} parent=5 // pred_region
        // Predicated region
        $region21: #{swiglu.1} parent=19 // pred_check
          %p223 = pneg %p76
        $region22: #{swiglu.1} parent=19 // pred_check_branch
          %225 = sbr.rel (%p223) target = $region24
        $region23: #{swiglu.1} parent=19 // pred_region
          %s226 = sand.u32 %s18, 1
          %s227 = scalar_lea.sflag [#allocation6], %s226
          %s228 = sand.u32 %s66, 1
          %s229 = smul.addr %s228, 128
          %s230 = scalar_lea.vmem [#allocation5], %s229
          %s232 = ssub.s32 2048, 2048
          %233 = vsyncadd %s227, %s232
          %s234 = smul.addr %s26, 128
          %s235 = scalar_lea.hbm %s1, %s234
          %s236 = sshll.u32 %s230, 4
          %s237 = int_to_ptr.vmem [resolvable:$true] %s236
          %242 = dma.hbm_to_vmem [thread:$0]  %s235, 2048, %s237, %s227, 256, 128, 8
        $region24: #{swiglu.1} parent=19 // pred_fallthru
          _
        // Predicated region
        $region25: #{swiglu.1} parent=19 // pred_check
          %p243 = pneg %p102
        $region26: #{swiglu.1} parent=19 // pred_check_branch
          %245 = sbr.rel (%p243) target = $region28
        $region27: #{swiglu.1} parent=19 // pred_region
          %p246 = scmp.lt.s32.totalorder %s26, 1
          %s247 = scalar_select %p246, %s26, 1
          %s248 = scalar_lea.vmem %s2, %s247
        $region28: #{swiglu.1} parent=19 // pred_fallthru
          _
        // Predicated region
        $region29: #{swiglu.1} parent=19 // pred_check
          %p249 = pneg %p128
        $region30: #{swiglu.1} parent=19 // pred_check_branch
          %251 = sbr.rel (%p249) target = $region32
        $region31: #{swiglu.1} parent=19 // pred_region
          %s252 = sand.u32 %s18, 1
          %s253 = scalar_lea.sflag [#allocation6], %s252
          %s254 = sand.u32 %s118, 1
          %s255 = smul.addr %s254, 128
          %s256 = scalar_lea.vmem [#allocation7], %s255
          %s258 = ssub.s32 2048, 2048
          %259 = vsyncadd %s253, %s258
          %s260 = smul.addr %s26, 128
          %s261 = scalar_lea.hbm %s3, %s260
          %s262 = sshll.u32 %s256, 4
          %s263 = int_to_ptr.vmem [resolvable:$true] %s262
          %268 = dma.hbm_to_vmem [thread:$0]  %s261, 2048, %s263, %s253, 256, 128, 8
        $region32: #{swiglu.1} parent=19 // pred_fallthru
          _
        // Predicated region
        $region33: #{swiglu.1} parent=19 // pred_check
          %p269 = pneg %p154
        $region34: #{swiglu.1} parent=19 // pred_check_branch
          %271 = sbr.rel (%p269) target = $region36
        $region35: #{swiglu.1} parent=19 // pred_region
          %p272 = scmp.lt.s32.totalorder %s26, 1
          %s273 = scalar_select %p272, %s26, 1
          %s274 = scalar_lea.vmem %s4, %s273
        $region36: #{swiglu.1} parent=19 // pred_fallthru
          _
      $region20: #{swiglu.1} parent=5 // pred_fallthru
        _
      %p275 = scmp.le.s32.totalorder 1, %s18
      %p276 = scmp.lt.s32.totalorder %s18, 3
      %p277 = pnand %p275, %p276
      %p278 = pneg %p277
      // Predicated region
      $region37: #{swiglu.1} parent=5 // pred_check
        _
      $region38: #{swiglu.1} parent=5 // pred_check_branch
        %280 = sbr.rel (%p277) target = $region40
      $region39: #{swiglu.1} parent=5 // pred_region
        %s281 = ssub.s32 %s18, 1
        // Predicated region
        $region41: #{swiglu.1} parent=39 // pred_check
          %p282 = pneg %p56
        $region42: #{swiglu.1} parent=39 // pred_check_branch
          %284 = sbr.rel (%p282) target = $region44
        $region43: #{swiglu.1} parent=39 // pred_region
          %285 = dma.done [#allocation3], 512
        $region44: #{swiglu.1} parent=39 // pred_fallthru
          _
        %s286 = sand.u32 %s23, 1
        %s287 = scalar_lea.sflag [#allocation6], %s286
        %s288 = sand.u32 %s69, 1
        %s289 = smul.addr %s288, 128
        %s290 = scalar_lea.vmem [#allocation5], %s289
        // Predicated region
        $region45: #{swiglu.1} parent=39 // pred_check
          %p291 = pneg %p82
        $region46: #{swiglu.1} parent=39 // pred_check_branch
          %293 = sbr.rel (%p291) target = $region48
        $region47: #{swiglu.1} parent=39 // pred_region
          %294 = dma.done %s287, 2048
        $region48: #{swiglu.1} parent=39 // pred_fallthru
          _
        %s295 = sand.u32 %s23, 1
        %s296 = scalar_lea.sflag [#allocation6], %s295
        %s297 = sand.u32 %s121, 1
        %s298 = smul.addr %s297, 128
        %s299 = scalar_lea.vmem [#allocation7], %s298
        // Predicated region
        $region49: #{swiglu.1} parent=39 // pred_check
          %p300 = pneg %p134
        $region50: #{swiglu.1} parent=39 // pred_check_branch
          %302 = sbr.rel (%p300) target = $region52
        $region51: #{swiglu.1} parent=39 // pred_region
          %303 = dma.done %s296, 2048
        $region52: #{swiglu.1} parent=39 // pred_fallthru
          _
        %p304 = pneg %p56
        %p305 = pneg %p53
        %s306 = sand.u32 %s23, 1
        %s307 = scalar_lea.sflag [#allocation6], %s306
        %s308 = sand.u32 %s69, 1
        %s309 = smul.addr %s308, 128
        %s310 = scalar_lea.vmem [#allocation5], %s309
        %p311 = pneg %p82
        %p312 = pneg %p79
        %p313 = scmp.lt.s32.totalorder %s28, 1
        %s314 = scalar_select %p313, %s28, 1
        %s315 = scalar_lea.vmem %s2, %s314
        %p316 = pneg %p108
        %p317 = pneg %p105
        %s318 = sand.u32 %s23, 1
        %s319 = scalar_lea.sflag [#allocation6], %s318
        %s320 = sand.u32 %s121, 1
        %s321 = smul.addr %s320, 128
        %s322 = scalar_lea.vmem [#allocation7], %s321
        %p323 = pneg %p134
        %p324 = pneg %p131
        %p325 = scmp.lt.s32.totalorder %s28, 1
        %s326 = scalar_select %p325, %s28, 1
        %s327 = scalar_lea.vmem %s4, %s326
        %p328 = pneg %p160
        %p329 = pneg %p157
        %p330 = pneg %p188
        %p331 = pneg %p185
        %s332 = sand.u32 %s175, 1
        %s333 = scalar_lea.sflag [#allocation4], %s332
        %s334 = sand.u32 %s175, 1
        %s335 = smul.addr %s334, 32
        %s336 = scalar_lea.vmem [#allocation8], %s335
        %s337 = smul.u32 4, %s27
        %p338 = scmp.lt.s32.totalorder %s28, 1
        %s339 = scalar_select %p338, %s28, 1
        %s340 = scalar_lea.vmem %s2, %s339
        %p341 = scmp.lt.s32.totalorder %s28, 1
        %s342 = scalar_select %p341, %s28, 1
        %s343 = scalar_lea.vmem %s4, %s342
        %s344 = smul.u32 4, %s27
        %v345 = vld [vmem:[#allocation2] sm:$0xff]
        %v346 = vld [vmem:[#allocation2 + $0x8] sm:$0xff]
        %v347 = vld [vmem:[#allocation2 + $0x10] sm:$0xff]
        %v348 = vld [vmem:[#allocation2 + $0x18] sm:$0xff]
        %v349 = vld [vmem:[%s290] sm:$0xff]
        %v350 = vld [vmem:[%s290 + $0x8] sm:$0xff]
        %v351 = vld [vmem:[%s290 + $0x10] sm:$0xff]
        %v352 = vld [vmem:[%s290 + $0x18] sm:$0xff]
        %v353 = vld [vmem:[%s290 + $0x20] sm:$0xff]
        %v354 = vld [vmem:[%s290 + $0x28] sm:$0xff]
        %v355 = vld [vmem:[%s290 + $0x30] sm:$0xff]
        %v356 = vld [vmem:[%s290 + $0x38] sm:$0xff]
        %v357 = vld [vmem:[%s290 + $0x40] sm:$0xff]
        %v358 = vld [vmem:[%s290 + $0x48] sm:$0xff]
        %v359 = vld [vmem:[%s290 + $0x50] sm:$0xff]
        %v360 = vld [vmem:[%s290 + $0x58] sm:$0xff]
        %v361 = vld [vmem:[%s290 + $0x60] sm:$0xff]
        %v362 = vld [vmem:[%s290 + $0x68] sm:$0xff]
        %v363 = vld [vmem:[%s290 + $0x70] sm:$0xff]
        %v364 = vld [vmem:[%s290 + $0x78] sm:$0xff]
        %v365 = vld [vmem:[%s340] sm:$0x1]
        %v367 = vlaneseq
        %v368 = vshrl.u32 %v367, 7
        %v369 = vsub.s32 0, %v368
        %v370 = vrot.slane %v365, %v369
        %372 = vmatprep.subr.mxu0 0.0
        %373 = vmatpush1.msra.mxu0 %v349
        %374 = vmatprep.subr.mxu0 0.0
        %375 = vmatpush1.msra.mxu0 %v350
        %376 = vmatprep.subr.mxu0 0.0
        %377 = vmatpush1.msra.mxu0 %v351
        %378 = vmatprep.subr.mxu0 0.0
        %379 = vmatpush1.msra.mxu0 %v352
        %380 = vmatprep.subr.mxu0 0.0
        %381 = vmatpush1.msra.mxu0 %v353
        %382 = vmatprep.subr.mxu0 0.0
        %383 = vmatpush1.msra.mxu0 %v354
        %384 = vmatprep.subr.mxu0 0.0
        %385 = vmatpush1.msra.mxu0 %v355
        %386 = vmatprep.subr.mxu0 0.0
        %387 = vmatpush1.msra.mxu0 %v356
        %388 = vmatprep.subr.mxu0 0.0
        %389 = vmatpush1.msra.mxu0 %v357
        %390 = vmatprep.subr.mxu0 0.0
        %391 = vmatpush1.msra.mxu0 %v358
        %392 = vmatprep.subr.mxu0 0.0
        %393 = vmatpush1.msra.mxu0 %v359
        %394 = vmatprep.subr.mxu0 0.0
        %395 = vmatpush1.msra.mxu0 %v360
        %396 = vmatprep.subr.mxu0 0.0
        %397 = vmatpush1.msra.mxu0 %v361
        %398 = vmatprep.subr.mxu0 0.0
        %399 = vmatpush1.msra.mxu0 %v362
        %400 = vmatprep.subr.mxu0 0.0
        %401 = vmatpush1.msra.mxu0 %v363
        %402 = vmatprep.subr.mxu0 0.0
        %403 = vmatpush1.msra.mxu0 %v364
        %404 = vmatprep.subr.mxu0 0.0
        %405 = vmatpush1.msra.mxu0 0.0
        %406 = vmatprep.subr.mxu0 0.0
        %407 = vmatpush1.msra.mxu0 0.0
        %408 = vmatprep.subr.mxu0 0.0
        %409 = vmatpush1.msra.mxu0 0.0
        %410 = vmatprep.subr.mxu0 0.0
        %411 = vmatpush1.msra.mxu0 0.0
        %412 = vmatprep.subr.mxu0 0.0
        %413 = vmatpush1.msra.mxu0 0.0
        %414 = vmatprep.subr.mxu0 0.0
        %415 = vmatpush1.msra.mxu0 0.0
        %416 = vmatprep.subr.mxu0 0.0
        %417 = vmatpush1.msra.mxu0 0.0
        %418 = vmatprep.subr.mxu0 0.0
        %419 = vmatpush1.msra.mxu0 0.0
        %420 = vmatprep.subr.mxu0 0.0
        %421 = vmatpush1.msra.mxu0 0.0
        %422 = vmatprep.subr.mxu0 0.0
        %423 = vmatpush1.msra.mxu0 0.0
        %424 = vmatprep.subr.mxu0 0.0
        %425 = vmatpush1.msra.mxu0 0.0
        %426 = vmatprep.subr.mxu0 0.0
        %427 = vmatpush1.msra.mxu0 0.0
        %428 = vmatprep.subr.mxu0 0.0
        %429 = vmatpush1.msra.mxu0 0.0
        %430 = vmatprep.subr.mxu0 0.0
        %431 = vmatpush1.msra.mxu0 0.0
        %432 = vmatprep.subr.mxu0 0.0
        %433 = vmatpush1.msra.mxu0 0.0
        %434 = vmatprep.subr.mxu0 0.0
        %435 = vmatpush1.msra.mxu0 0.0
        %436 = vmatprep.mubr.f32.mxu0 0.0
        %437 = vmatmul.mubr.f32.gmra.mrb[0].mxu0 %v345
        %v438 = vpop.f32.mrb[0].mxu0
        %v439 = vadd.f32 %v370, %v438
        %v440 = vpop.f32.mrb[0].mxu0
        %441 = vmatprep.mubr.f32.mxu0 0.0
        %442 = vmatmul.mubr.f32.gmra.mrb[0].mxu0 %v346
        %v443 = vpop.f32.mrb[0].mxu0
        %v444 = vadd.f32 %v370, %v443
        %v445 = vpop.f32.mrb[0].mxu0
        %446 = vmatprep.mubr.f32.mxu0 0.0
        %447 = vmatmul.mubr.f32.gmra.mrb[0].mxu0 %v347
        %v448 = vpop.f32.mrb[0].mxu0
        %v449 = vadd.f32 %v370, %v448
        %v450 = vpop.f32.mrb[0].mxu0
        %451 = vmatprep.mubr.f32.mxu0 0.0
        %452 = vmatmul.mubr.f32.gmra.mrb[0].mxu0 %v348
        %v453 = vpop.f32.mrb[0].mxu0
        %v454 = vadd.f32 %v370, %v453
        %v455 = vpop.f32.mrb[0].mxu0
        %456 = vdwg.mxu0
        %v457 = vld [vmem:[%s299] sm:$0xff]
        %v458 = vld [vmem:[%s299 + $0x8] sm:$0xff]
        %v459 = vld [vmem:[%s299 + $0x10] sm:$0xff]
        %v460 = vld [vmem:[%s299 + $0x18] sm:$0xff]
        %v461 = vld [vmem:[%s299 + $0x20] sm:$0xff]
        %v462 = vld [vmem:[%s299 + $0x28] sm:$0xff]
        %v463 = vld [vmem:[%s299 + $0x30] sm:$0xff]
        %v464 = vld [vmem:[%s299 + $0x38] sm:$0xff]
        %v465 = vld [vmem:[%s299 + $0x40] sm:$0xff]
        %v466 = vld [vmem:[%s299 + $0x48] sm:$0xff]
        %v467 = vld [vmem:[%s299 + $0x50] sm:$0xff]
        %v468 = vld [vmem:[%s299 + $0x58] sm:$0xff]
        %v469 = vld [vmem:[%s299 + $0x60] sm:$0xff]
        %v470 = vld [vmem:[%s299 + $0x68] sm:$0xff]
        %v471 = vld [vmem:[%s299 + $0x70] sm:$0xff]
        %v472 = vld [vmem:[%s299 + $0x78] sm:$0xff]
        %v473 = vld [vmem:[%s343] sm:$0x1]
        %v475 = vlaneseq
        %v476 = vshrl.u32 %v475, 7
        %v477 = vsub.s32 0, %v476
        %v478 = vrot.slane %v473, %v477
        %480 = vmatprep.subr.mxu0 0.0
        %481 = vmatpush1.msra.mxu0 %v457
        %482 = vmatprep.subr.mxu0 0.0
        %483 = vmatpush1.msra.mxu0 %v458
        %484 = vmatprep.subr.mxu0 0.0
        %485 = vmatpush1.msra.mxu0 %v459
        %486 = vmatprep.subr.mxu0 0.0
        %487 = vmatpush1.msra.mxu0 %v460
        %488 = vmatprep.subr.mxu0 0.0
        %489 = vmatpush1.msra.mxu0 %v461
        %490 = vmatprep.subr.mxu0 0.0
        %491 = vmatpush1.msra.mxu0 %v462
        %492 = vmatprep.subr.mxu0 0.0
        %493 = vmatpush1.msra.mxu0 %v463
        %494 = vmatprep.subr.mxu0 0.0
        %495 = vmatpush1.msra.mxu0 %v464
        %496 = vmatprep.subr.mxu0 0.0
        %497 = vmatpush1.msra.mxu0 %v465
        %498 = vmatprep.subr.mxu0 0.0
        %499 = vmatpush1.msra.mxu0 %v466
        %500 = vmatprep.subr.mxu0 0.0
        %501 = vmatpush1.msra.mxu0 %v467
        %502 = vmatprep.subr.mxu0 0.0
        %503 = vmatpush1.msra.mxu0 %v468
        %504 = vmatprep.subr.mxu0 0.0
        %505 = vmatpush1.msra.mxu0 %v469
        %506 = vmatprep.subr.mxu0 0.0
        %507 = vmatpush1.msra.mxu0 %v470
        %508 = vmatprep.subr.mxu0 0.0
        %509 = vmatpush1.msra.mxu0 %v471
        %510 = vmatprep.subr.mxu0 0.0
        %511 = vmatpush1.msra.mxu0 %v472
        %512 = vmatprep.subr.mxu0 0.0
        %513 = vmatpush1.msra.mxu0 0.0
        %514 = vmatprep.subr.mxu0 0.0
        %515 = vmatpush1.msra.mxu0 0.0
        %516 = vmatprep.subr.mxu0 0.0
        %517 = vmatpush1.msra.mxu0 0.0
        %518 = vmatprep.subr.mxu0 0.0
        %519 = vmatpush1.msra.mxu0 0.0
        %520 = vmatprep.subr.mxu0 0.0
        %521 = vmatpush1.msra.mxu0 0.0
        %522 = vmatprep.subr.mxu0 0.0
        %523 = vmatpush1.msra.mxu0 0.0
        %524 = vmatprep.subr.mxu0 0.0
        %525 = vmatpush1.msra.mxu0 0.0
        %526 = vmatprep.subr.mxu0 0.0
        %527 = vmatpush1.msra.mxu0 0.0
        %528 = vmatprep.subr.mxu0 0.0
        %529 = vmatpush1.msra.mxu0 0.0
        %530 = vmatprep.subr.mxu0 0.0
        %531 = vmatpush1.msra.mxu0 0.0
        %532 = vmatprep.subr.mxu0 0.0
        %533 = vmatpush1.msra.mxu0 0.0
        %534 = vmatprep.subr.mxu0 0.0
        %535 = vmatpush1.msra.mxu0 0.0
        %536 = vmatprep.subr.mxu0 0.0
        %537 = vmatpush1.msra.mxu0 0.0
        %538 = vmatprep.subr.mxu0 0.0
        %539 = vmatpush1.msra.mxu0 0.0
        %540 = vmatprep.subr.mxu0 0.0
        %541 = vmatpush1.msra.mxu0 0.0
        %542 = vmatprep.subr.mxu0 0.0
        %543 = vmatpush1.msra.mxu0 0.0
        %544 = vmatprep.mubr.f32.mxu0 0.0
        %545 = vmatmul.mubr.f32.gmra.mrb[0].mxu0 %v345
        %v546 = vpop.f32.mrb[0].mxu0
        %v547 = vadd.f32 %v478, %v546
        %v548 = vpop.f32.mrb[0].mxu0
        %549 = vmatprep.mubr.f32.mxu0 0.0
        %550 = vmatmul.mubr.f32.gmra.mrb[0].mxu0 %v346
        %v551 = vpop.f32.mrb[0].mxu0
        %v552 = vadd.f32 %v478, %v551
        %v553 = vpop.f32.mrb[0].mxu0
        %554 = vmatprep.mubr.f32.mxu0 0.0
        %555 = vmatmul.mubr.f32.gmra.mrb[0].mxu0 %v347
        %v556 = vpop.f32.mrb[0].mxu0
        %v557 = vadd.f32 %v478, %v556
        %v558 = vpop.f32.mrb[0].mxu0
        %559 = vmatprep.mubr.f32.mxu0 0.0
        %560 = vmatmul.mubr.f32.gmra.mrb[0].mxu0 %v348
        %v561 = vpop.f32.mrb[0].mxu0
        %v562 = vadd.f32 %v478, %v561
        %v563 = vpop.f32.mrb[0].mxu0
        %564 = vdwg.mxu0
        %v565 = vmul.f32 %v439, 0.5
        %v566 = vmul.f32 %v444, 0.5
        %v567 = vmul.f32 %v449, 0.5
        %v568 = vmul.f32 %v454, 0.5
        %v569 = vtanh.pop %v565
        %v570 = vtanh.pop %v566
        %v571 = vtanh.pop %v567
        %v572 = vtanh.pop %v568
        %v573 = vadd.f32 %v569, 1.0
        %v574 = vadd.f32 %v570, 1.0
        %v575 = vadd.f32 %v571, 1.0
        %v576 = vadd.f32 %v572, 1.0
        %v577 = vmul.f32 %v573, 0.5
        %v578 = vmul.f32 %v574, 0.5
        %v579 = vmul.f32 %v575, 0.5
        %v580 = vmul.f32 %v576, 0.5
        %v581 = vmul.f32 %v547, 0.5
        %v582 = vmul.f32 %v552, 0.5
        %v583 = vmul.f32 %v557, 0.5
        %v584 = vmul.f32 %v562, 0.5
        %v585 = vtanh.pop %v581
        %v586 = vtanh.pop %v582
        %v587 = vtanh.pop %v583
        %v588 = vtanh.pop %v584
        %v589 = vadd.f32 %v585, 1.0
        %v590 = vadd.f32 %v586, 1.0
        %v591 = vadd.f32 %v587, 1.0
        %v592 = vadd.f32 %v588, 1.0
        %v593 = vmul.f32 %v589, 0.5
        %v594 = vmul.f32 %v590, 0.5
        %v595 = vmul.f32 %v591, 0.5
        %v596 = vmul.f32 %v592, 0.5
        %v597 = vmul.f32 %v439, %v577
        %v598 = vmul.f32 %v444, %v578
        %v599 = vmul.f32 %v449, %v579
        %v600 = vmul.f32 %v454, %v580
        %v601 = vmul.f32 %v597, %v593
        %v602 = vmul.f32 %v598, %v594
        %v603 = vmul.f32 %v599, %v595
        %v604 = vmul.f32 %v600, %v596
        %605 = vst [vmem:[%s336] sm:$0xff] %v601
        %606 = vst [vmem:[%s336 + $0x8] sm:$0xff] %v602
        %607 = vst [vmem:[%s336 + $0x10] sm:$0xff] %v603
        %608 = vst [vmem:[%s336 + $0x18] sm:$0xff] %v604
        %s609 = sand.u32 %s175, 1
        %s610 = scalar_lea.sflag [#allocation4], %s609
        %s611 = sand.u32 %s175, 1
        %s612 = smul.addr %s611, 32
        %s613 = scalar_lea.vmem [#allocation8], %s612
        // Predicated region
        $region53: #{swiglu.1} parent=39 // pred_check
          %p614 = pneg %p185
        $region54: #{swiglu.1} parent=39 // pred_check_branch
          %616 = sbr.rel (%p614) target = $region56
        $region55: #{swiglu.1} parent=39 // pred_region
          %s617 = smul.u32 4, %s27
          %s619 = ssub.s32 512, 512
          %620 = vsyncadd %s610, %s619
          %s621 = smul.addr %s617, 2
          %s622 = sadd.s32 %s28, %s621
          %s623 = smul.addr %s622, 128
          %s624 = scalar_lea.hbm %s5, %s623
          %s625 = sshll.u32 %s613, 4
          %s626 = int_to_ptr.vmem [resolvable:$true] %s625
          %631 = dma.vmem_to_hbm [thread:$0]  %s626, 512, %s624, %s610, 128, 256, 8
        $region56: #{swiglu.1} parent=39 // pred_fallthru
          _
      $region40: #{swiglu.1} parent=5 // pred_fallthru
        _
      %p632 = scmp.le.s32.totalorder 2, %s18
      // Predicated region
      $region57: #{swiglu.1} parent=5 // pred_check
        %p633 = pneg %p632
      $region58: #{swiglu.1} parent=5 // pred_check_branch
        %635 = sbr.rel (%p633) target = $region60
      $region59: #{swiglu.1} parent=5 // pred_region
        %s636 = ssub.s32 %s18, 2
        // Predicated region
        $region61: #{swiglu.1} parent=59 // pred_check
          %p637 = pneg %p191
        $region62: #{swiglu.1} parent=59 // pred_check_branch
          %639 = sbr.rel (%p637) target = $region64
        $region63: #{swiglu.1} parent=59 // pred_region
          %s640 = sand.u32 %s176, 1
          %s641 = scalar_lea.sflag [#allocation4], %s640
          %s642 = sand.u32 %s176, 1
          %s643 = smul.addr %s642, 32
          %s644 = scalar_lea.vmem [#allocation8], %s643
          %645 = dma.done %s641, 512
        $region64: #{swiglu.1} parent=59 // pred_fallthru
          _
      $region60: #{swiglu.1} parent=5 // pred_fallthru
        _
    $region6: #{swiglu.1} parent=1 // loop_footer
      %s22 = sadd.s32 1, %s18
    $region7: #{swiglu.1} parent=1 // loop_footer_branch
      %17 = sbr.rel target = $region3
    $region8: #{swiglu.1} parent=1 // loop_exit
      _
    %646 = vsyncpa [#allocation3], 1
    %s647 = scalar_lea.sflag [#allocation3], 1
    %648 = vsyncpa %s647, 1
    %649 = vsyncpa [#allocation6], 1
    %s650 = scalar_lea.sflag [#allocation6], 1
    %651 = vsyncpa %s650, 1
    %652 = vsyncpa [#allocation4], 1
    %s653 = scalar_lea.sflag [#allocation4], 1
    %654 = vsyncpa %s653, 1

</llo_original>
